<compile_context>
chip_gen: v6e
topology: v6e:2x2x1
jax: 0.10.0
libtpu: 0.0.40
codegen_flags: <defaults>
</compile_context>

<pallas_src>
import functools

import jax
import jax.numpy as jnp
import numpy as np
from jax import lax
from jax.experimental import pallas as pl
from jax.experimental.pallas import tpu as pltpu


def _vmem_capacity_bytes():
    """Physical VMEM per core; conservative (v7x) default if the query fails."""
    try:
        return int(pltpu.get_tpu_info().vmem_capacity_bytes)
    except Exception:
        return 64 << 20


def _largest_aligned_divisor(n, cap, step=128):
    """Largest multiple of `step` dividing `n` that is <= cap (0 if none)."""
    best = 0
    m = step
    top = min(n, cap)
    while m <= top:
        if n % m == 0:
            best = m
        m += step
    return best


def _choose_tiles(HW, C, itemsize, vmem_limit):
    """Pick (TN output tile, TK source chunk), lane-aligned, fitting VMEM."""
    if HW % 128 != 0:
        return HW, HW  # tiny / oddly-shaped images: single tile, single chunk
    # Budget = scoped limit minus the double-buffered resident [C, HW] image
    # block minus fixed headroom for coords/out blocks, accumulator and code.
    budget = max(vmem_limit - 2 * C * HW * itemsize - (6 << 20), 2 << 20)
    tn = _largest_aligned_divisor(HW, 1024) or HW
    tk = _largest_aligned_divisor(HW, 2048) or HW

    def chunk_temp_bytes(tk_, tn_):
        # ~6 live 4-byte [TK, TN] temporaries while building one ST chunk.
        return 6 * 4 * tk_ * tn_

    while chunk_temp_bytes(tk, tn) > budget and tk > 128:
        tk = _largest_aligned_divisor(HW, tk // 2) or 128
    while chunk_temp_bytes(tk, tn) > budget and tn > 128:
        tn = _largest_aligned_divisor(HW, tn // 2) or 128
    return tn, tk


def _warp_kernel(klo_ref, khi_ref, coord_ref, img_ref, out_ref, acc_ref,
                 *, H, W, TK, TN, n_tiles):
    b = pl.program_id(0)
    t = pl.program_id(1)

    co = coord_ref[0]                       # [2, TN] absolute sample coords (f32)
    src_y = co[0:1, :]                      # [1, TN] row coordinate
    src_x = co[1:2, :]                      # [1, TN] col coordinate

    y0f = jnp.floor(src_y)
    x0f = jnp.floor(src_x)
    fy = src_y - y0f
    fx = src_x - x0f
    y0 = y0f.astype(jnp.int32)
    x0 = x0f.astype(jnp.int32)

    # padding_mode='zeros': out-of-range corners get exactly-zero weight.
    vy0 = ((y0 >= 0) & (y0 < H)).astype(jnp.float32)
    vy1 = ((y0 >= -1) & (y0 < H - 1)).astype(jnp.float32)   # y1 = y0 + 1 valid
    vx0 = ((x0 >= 0) & (x0 < W)).astype(jnp.float32)
    vx1 = ((x0 >= -1) & (x0 < W - 1)).astype(jnp.float32)   # x1 = x0 + 1 valid

    w00 = (1.0 - fy) * (1.0 - fx) * vy0 * vx0                # [1, TN]
    w01 = (1.0 - fy) * fx * vy0 * vx1
    w10 = fy * (1.0 - fx) * vy1 * vx0
    w11 = fy * fx * vy1 * vx1

    i00 = y0 * W + x0                                        # [1, TN] flat top-left

    # Hoisted once per grid step; inside the chunk loop it is a vld, not a
    # re-materialized VALU iota.
    q_base = lax.broadcasted_iota(jnp.int32, (TK, TN), 0)

    acc_ref[...] = jnp.zeros_like(acc_ref)

    # Data-dependent chunk range (precomputed in the wrapper, SMEM-prefetched):
    # only source chunks overlapping [min(i00), max(i00)+W+1] can contribute.
    sched = b * n_tiles + t
    klo = klo_ref[sched]
    khi = khi_ref[sched]

    def chunk_body(k, carry):
        start = pl.multiple_of(k * TK, TK)
        # d[q, p] = (global source id of row q in this chunk) - i00[p]
        d = q_base - (i00 - start)                           # [TK, TN]
        # Degenerate W == 1: d==1 and d==W coincide, so both selects fire for
        # the same q; the vx1 validity factor makes w01 == w11 == 0 there, so
        # the double-add is benign.  Do not remove the validity factors.
        row0 = jnp.where(d == 0, w00, jnp.where(d == 1, w01, 0.0))
        row1 = jnp.where(d == W, w10, jnp.where(d == W + 1, w11, 0.0))
        st = (row0 + row1).astype(img_ref.dtype)             # [TK, TN]
        img_chunk = img_ref[0, :, pl.ds(start, TK)]          # [C, TK] native dtype
        acc_ref[...] += jnp.dot(img_chunk, st,
                                preferred_element_type=jnp.float32)
        return carry

    lax.fori_loop(klo, khi, chunk_body, 0)
    out_ref[0] = acc_ref[...].astype(out_ref.dtype)


def warp(flow, image, *, tile_n=None, tile_k=None):
    """Pallas Warp.forward: flow [B,2,H,W], image [B,C,H,W] -> [B,C,H,W]."""
    B, C, H, W = image.shape
    assert flow.shape == (B, 2, H, W), (flow.shape, image.shape)
    HW = H * W
    itemsize = image.dtype.itemsize

    vmem_cap = _vmem_capacity_bytes()
    vmem_limit = max(min((vmem_cap * 3) // 4, 100 << 20), 32 << 20)

    auto_tn, auto_tk = _choose_tiles(HW, C, itemsize, vmem_limit)
    TN = int(tile_n) if tile_n is not None else auto_tn
    TK = int(tile_k) if tile_k is not None else auto_tk
    assert HW % TN == 0 and (TN % 128 == 0 or TN == HW), (HW, TN)
    assert HW % TK == 0 and (TK % 128 == 0 or TK == HW), (HW, TK)
    n_tiles = HW // TN

    # Absolute (pixel-space) sampling coordinates, lane-dense [B, 2, HW].
    # (Same HBM traffic as flow itself; removes in-kernel //W and %W.)
    base_y = jnp.repeat(jnp.arange(H, dtype=jnp.float32), W)        # [HW]
    base_x = jnp.tile(jnp.arange(W, dtype=jnp.float32), H)          # [HW]
    base = jnp.stack([base_y, base_x], axis=0)                      # [2, HW]
    coords = flow.astype(jnp.float32).reshape(B, 2, HW) + base[None]

    # Per-(batch, output-tile) source-chunk range for the in-kernel skip.
    i00 = (jnp.floor(coords[:, 0]).astype(jnp.int32) * W
           + jnp.floor(coords[:, 1]).astype(jnp.int32))             # [B, HW]
    i00_t = i00.reshape(B, n_tiles, TN)
    lo = jnp.clip(jnp.min(i00_t, axis=-1), 0, HW - 1)
    hi = jnp.clip(jnp.max(i00_t, axis=-1) + W + 1, 0, HW - 1)
    k_lo = (lo // TK).astype(jnp.int32).reshape(-1)                 # [B*n_tiles]
    k_hi = ((hi // TK) + 1).astype(jnp.int32).reshape(-1)           # [B*n_tiles]

    img_flat = image.reshape(B, C, HW)

    kernel = functools.partial(_warp_kernel, H=H, W=W, TK=TK, TN=TN,
                               n_tiles=n_tiles)

    # Advisory cost: each output tile touches roughly (TN/W + 6) source rows.
    span_rows = min(H, TN // max(W, 1) + 6)
    k_work = min(HW, pl.cdiv(span_rows * W, TK) * TK)
    cost = pl.CostEstimate(
        flops=int(2 * B * C * HW * k_work),
        transcendentals=0,
        bytes_accessed=int(4 * B * 2 * HW + 2 * itemsize * B * C * HW),
    )

    # Megacore: shard over batch when possible so each core keeps one [C, HW]
    # image block resident across the (arbitrary) tile axis; with B == 1 give
    # the tile axis to both cores instead (accepting the duplicate image DMA).
    dims = ("parallel", "arbitrary") if B >= 2 else ("arbitrary", "parallel")

    out_flat = pl.pallas_call(
        kernel,
        out_shape=jax.ShapeDtypeStruct((B, C, HW), image.dtype),
        grid_spec=pltpu.PrefetchScalarGridSpec(
            num_scalar_prefetch=2,
            grid=(B, n_tiles),
            in_specs=[
                pl.BlockSpec((1, 2, TN), lambda b, t, *_: (b, 0, t)),
                pl.BlockSpec((1, C, HW), lambda b, t, *_: (b, 0, 0)),
            ],
            out_specs=pl.BlockSpec((1, C, TN), lambda b, t, *_: (b, 0, t)),
            scratch_shapes=[pltpu.VMEM((C, TN), jnp.float32)],
        ),
        compiler_params=pltpu.CompilerParams(
            dimension_semantics=dims,
            vmem_limit_bytes=int(vmem_limit),
        ),
        cost_estimate=cost,
    )(k_lo, k_hi, coords, img_flat)
    return out_flat.reshape(B, C, H, W)


def warp_ref(flow, image):
    """Pure-JAX reference (same math as F.grid_sample bilinear/zeros/align)."""
    B, C, H, W = image.shape
    HW = H * W
    by = jnp.arange(H, dtype=jnp.float32)[None, :, None]
    bx = jnp.arange(W, dtype=jnp.float32)[None, None, :]
    src_y = by + flow[:, 0]
    src_x = bx + flow[:, 1]
    y0 = jnp.floor(src_y)
    x0 = jnp.floor(src_x)
    fy = src_y - y0
    fx = src_x - x0
    y0i = y0.astype(jnp.int32)
    x0i = x0.astype(jnp.int32)
    img_flat = image.reshape(B, C, HW)

    def corner(yi, xi, w):
        valid = (yi >= 0) & (yi <= H - 1) & (xi >= 0) & (xi <= W - 1)
        yc = jnp.clip(yi, 0, H - 1)
        xc = jnp.clip(xi, 0, W - 1)
        idx = (yc * W + xc).reshape(B, 1, HW)
        vals = jnp.take_along_axis(img_flat, idx, axis=2).reshape(B, C, H, W)
        return vals * (w * valid.astype(jnp.float32))[:, None, :, :]

    out = (corner(y0i, x0i, (1 - fy) * (1 - fx)) +
           corner(y0i, x0i + 1, (1 - fy) * fx) +
           corner(y0i + 1, x0i, fy * (1 - fx)) +
           corner(y0i + 1, x0i + 1, fy * fx))
    return out


if __name__ == "__main__":
    key = jax.random.PRNGKey(0)
    k_img, k_flow, k_img2, k_flow2 = jax.random.split(key, 4)

    # Test 1: module-spec-sized inputs (B=2, C=4, 16x16), default tiling
    # (single tile / single chunk path).
    B, C, H, W = 2, 4, 16, 16
    image = jax.random.normal(k_img, (B, C, H, W), dtype=jnp.float32)
    # Displacements of a few pixels, some landing outside the image (zero pad),
    # including fractional hits on the y==H-1 / x==W-1 edges.
    flow = jax.random.normal(k_flow, (B, 2, H, W), dtype=jnp.float32) * 3.0

    out = warp(flow, image)
    jax.block_until_ready(out)
    ref = warp_ref(flow, image)
    if not np.allclose(np.asarray(out), np.asarray(ref), atol=1e-5, rtol=1e-5):
        raise AssertionError("Pallas Warp kernel mismatch vs reference (test 1)")

    # Test 2: exercise the spatial output-tile grid axis AND the data-dependent
    # source-chunk loop (HW=1024, TN=128 -> 8 tiles, TK=128 -> 8 chunks).
    B2, C2, H2, W2 = 1, 3, 32, 32
    image2 = jax.random.normal(k_img2, (B2, C2, H2, W2), dtype=jnp.float32)
    flow2 = jax.random.normal(k_flow2, (B2, 2, H2, W2), dtype=jnp.float32) * 5.0

    out2 = warp(flow2, image2, tile_n=128, tile_k=128)
    jax.block_until_ready(out2)
    ref2 = warp_ref(flow2, image2)
    if not np.allclose(np.asarray(out2), np.asarray(ref2), atol=1e-5, rtol=1e-5):
        raise AssertionError("Pallas Warp kernel mismatch vs reference (test 2, tiled)")

    print("KERNEL_OK")
</pallas_src>

<mosaic_0001>
module attributes {stable_mosaic.version = 11 : i64} {
  func.func @_warp_kernel(%arg0: i32, %arg1: i32, %arg2: memref<2xi32, #tpu.memory_space<smem>>, %arg3: memref<2xi32, #tpu.memory_space<smem>>, %arg4: memref<1x2x256xf32, #tpu.memory_space<vmem>>, %arg5: memref<1x4x256xf32, #tpu.memory_space<vmem>>, %arg6: memref<1x4x256xf32, #tpu.memory_space<vmem>>, %arg7: memref<4x256xf32, #tpu.memory_space<vmem>>) attributes {dimension_semantics = [#tpu.dimension_semantics<parallel>, #tpu.dimension_semantics<arbitrary>], iteration_bounds = array<i64: 2, 1>, scalar_prefetch = 2 : i64, scratch_operands = 1 : i64, tpu.core_type = #tpu.core_type<tc>, window_params = [{transform_indices = @transform_0, window_bounds = array<i64: 1, 2, 256>}, {transform_indices = @transform_1, window_bounds = array<i64: 1, 4, 256>}, {transform_indices = @transform_2, window_bounds = array<i64: 1, 4, 256>}]} {
    %c0 = arith.constant 0 : index
    %c0_0 = arith.constant 0 : index
    %c0_1 = arith.constant 0 : index
    %0 = vector.load %arg4[%c0, %c0_0, %c0_1] : memref<1x2x256xf32, #tpu.memory_space<vmem>>, vector<1x2x256xf32>
    %1 = vector.shape_cast %0 : vector<1x2x256xf32> to vector<2x256xf32>
    %2 = vector.extract_strided_slice %1 {offsets = [0, 0], sizes = [1, 256], strides = [1, 1]} : vector<2x256xf32> to vector<1x256xf32>
    %3 = vector.extract_strided_slice %1 {offsets = [1, 0], sizes = [1, 256], strides = [1, 1]} : vector<2x256xf32> to vector<1x256xf32>
    %4 = math.floor %2 : vector<1x256xf32>
    %5 = math.floor %3 : vector<1x256xf32>
    %6 = arith.subf %2, %4 : vector<1x256xf32>
    %7 = arith.subf %3, %5 : vector<1x256xf32>
    %8 = arith.fptosi %4 : vector<1x256xf32> to vector<1x256xi32>
    %9 = arith.fptosi %5 : vector<1x256xf32> to vector<1x256xi32>
    %c0_i32 = arith.constant 0 : i32
    %10 = vector.broadcast %c0_i32 : i32 to vector<1x256xi32>
    %11 = arith.cmpi sge, %8, %10 : vector<1x256xi32>
    %c16_i32 = arith.constant 16 : i32
    %12 = vector.broadcast %c16_i32 : i32 to vector<1x256xi32>
    %13 = arith.cmpi slt, %8, %12 : vector<1x256xi32>
    %14 = arith.andi %11, %13 : vector<1x256xi1>
    %15 = arith.extui %14 : vector<1x256xi1> to vector<1x256xi32>
    %16 = arith.sitofp %15 : vector<1x256xi32> to vector<1x256xf32>
    %c-1_i32 = arith.constant -1 : i32
    %17 = vector.broadcast %c-1_i32 : i32 to vector<1x256xi32>
    %18 = arith.cmpi sge, %8, %17 : vector<1x256xi32>
    %c15_i32 = arith.constant 15 : i32
    %19 = vector.broadcast %c15_i32 : i32 to vector<1x256xi32>
    %20 = arith.cmpi slt, %8, %19 : vector<1x256xi32>
    %21 = arith.andi %18, %20 : vector<1x256xi1>
    %22 = arith.extui %21 : vector<1x256xi1> to vector<1x256xi32>
    %23 = arith.sitofp %22 : vector<1x256xi32> to vector<1x256xf32>
    %c0_i32_2 = arith.constant 0 : i32
    %24 = vector.broadcast %c0_i32_2 : i32 to vector<1x256xi32>
    %25 = arith.cmpi sge, %9, %24 : vector<1x256xi32>
    %c16_i32_3 = arith.constant 16 : i32
    %26 = vector.broadcast %c16_i32_3 : i32 to vector<1x256xi32>
    %27 = arith.cmpi slt, %9, %26 : vector<1x256xi32>
    %28 = arith.andi %25, %27 : vector<1x256xi1>
    %29 = arith.extui %28 : vector<1x256xi1> to vector<1x256xi32>
    %30 = arith.sitofp %29 : vector<1x256xi32> to vector<1x256xf32>
    %c-1_i32_4 = arith.constant -1 : i32
    %31 = vector.broadcast %c-1_i32_4 : i32 to vector<1x256xi32>
    %32 = arith.cmpi sge, %9, %31 : vector<1x256xi32>
    %c15_i32_5 = arith.constant 15 : i32
    %33 = vector.broadcast %c15_i32_5 : i32 to vector<1x256xi32>
    %34 = arith.cmpi slt, %9, %33 : vector<1x256xi32>
    %35 = arith.andi %32, %34 : vector<1x256xi1>
    %36 = arith.extui %35 : vector<1x256xi1> to vector<1x256xi32>
    %37 = arith.sitofp %36 : vector<1x256xi32> to vector<1x256xf32>
    %cst = arith.constant 1.000000e+00 : f32
    %38 = vector.broadcast %cst : f32 to vector<1x256xf32>
    %39 = arith.subf %38, %6 : vector<1x256xf32>
    %cst_6 = arith.constant 1.000000e+00 : f32
    %40 = vector.broadcast %cst_6 : f32 to vector<1x256xf32>
    %41 = arith.subf %40, %7 : vector<1x256xf32>
    %42 = arith.mulf %39, %41 : vector<1x256xf32>
    %43 = arith.mulf %42, %16 : vector<1x256xf32>
    %44 = arith.mulf %43, %30 : vector<1x256xf32>
    %cst_7 = arith.constant 1.000000e+00 : f32
    %45 = vector.broadcast %cst_7 : f32 to vector<1x256xf32>
    %46 = arith.subf %45, %6 : vector<1x256xf32>
    %47 = arith.mulf %46, %7 : vector<1x256xf32>
    %48 = arith.mulf %47, %16 : vector<1x256xf32>
    %49 = arith.mulf %48, %37 : vector<1x256xf32>
    %cst_8 = arith.constant 1.000000e+00 : f32
    %50 = vector.broadcast %cst_8 : f32 to vector<1x256xf32>
    %51 = arith.subf %50, %7 : vector<1x256xf32>
    %52 = arith.mulf %6, %51 : vector<1x256xf32>
    %53 = arith.mulf %52, %23 : vector<1x256xf32>
    %54 = arith.mulf %53, %30 : vector<1x256xf32>
    %55 = arith.mulf %6, %7 : vector<1x256xf32>
    %56 = arith.mulf %55, %23 : vector<1x256xf32>
    %57 = arith.mulf %56, %37 : vector<1x256xf32>
    %c16_i32_9 = arith.constant 16 : i32
    %58 = vector.broadcast %c16_i32_9 : i32 to vector<1x256xi32>
    %59 = arith.muli %8, %58 : vector<1x256xi32>
    %60 = arith.addi %59, %9 : vector<1x256xi32>
    %61 = tpu.iota {dimensions = array<i32: 0>} : vector<256x256xi32>
    %cst_10 = arith.constant 0.000000e+00 : f32
    %62 = vector.broadcast %cst_10 : f32 to vector<4x256xf32>
    %c0_11 = arith.constant 0 : index
    %c0_12 = arith.constant 0 : index
    %63 = vector.load %arg7[%c0_11, %c0_12] : memref<4x256xf32, #tpu.memory_space<vmem>>, vector<4x256xf32>
    tpu.vector_store %arg7[%c0_11, %c0_12], %62 {strides = array<i32>} : memref<4x256xf32, #tpu.memory_space<vmem>>, vector<4x256xf32>,
    %c1_i32 = arith.constant 1 : i32
    %64 = arith.muli %arg0, %c1_i32 : i32
    %65 = arith.addi %64, %arg1 : i32
    %66 = arith.index_cast %65 : i32 to index
    %67 = memref.load %arg2[%66] : memref<2xi32, #tpu.memory_space<smem>>
    %68 = arith.index_cast %65 : i32 to index
    %69 = memref.load %arg3[%68] : memref<2xi32, #tpu.memory_space<smem>>
    %c0_i32_13 = arith.constant 0 : i32
    %70 = arith.subi %69, %67 : i32
    %71 = arith.addi %67, %70 : i32
    %c1_i32_14 = arith.constant 1 : i32
    scf.for %arg8 = %67 to %71 step %c1_i32_14  : i32 {
      %c256_i32 = arith.constant 256 : i32
      %76 = arith.muli %arg8, %c256_i32 : i32
      %77 = tpu.assume_multiple %76, 256 : i32
      %78 = vector.broadcast %77 : i32 to vector<1x256xi32>
      %79 = arith.subi %60, %78 : vector<1x256xi32>
      %80 = vector.broadcast %79 : vector<1x256xi32> to vector<256x256xi32>
      %81 = arith.subi %61, %80 : vector<256x256xi32>
      %c0_i32_20 = arith.constant 0 : i32
      %82 = vector.broadcast %c0_i32_20 : i32 to vector<256x256xi32>
      %83 = arith.cmpi eq, %81, %82 : vector<256x256xi32>
      %c1_i32_21 = arith.constant 1 : i32
      %84 = vector.broadcast %c1_i32_21 : i32 to vector<256x256xi32>
      %85 = arith.cmpi eq, %81, %84 : vector<256x256xi32>
      %cst_22 = arith.constant 0.000000e+00 : f32
      %86 = vector.shape_cast %49 : vector<1x256xf32> to vector<1x256xf32>
      %87 = vector.broadcast %86 : vector<1x256xf32> to vector<256x256xf32>
      %88 = vector.broadcast %cst_22 : f32 to vector<256x256xf32>
      %89 = arith.select %85, %87, %88 : vector<256x256xi1>, vector<256x256xf32>
      %90 = vector.shape_cast %44 : vector<1x256xf32> to vector<1x256xf32>
      %91 = vector.broadcast %90 : vector<1x256xf32> to vector<256x256xf32>
      %92 = arith.select %83, %91, %89 : vector<256x256xi1>, vector<256x256xf32>
      %c16_i32_23 = arith.constant 16 : i32
      %93 = vector.broadcast %c16_i32_23 : i32 to vector<256x256xi32>
      %94 = arith.cmpi eq, %81, %93 : vector<256x256xi32>
      %c17_i32 = arith.constant 17 : i32
      %95 = vector.broadcast %c17_i32 : i32 to vector<256x256xi32>
      %96 = arith.cmpi eq, %81, %95 : vector<256x256xi32>
      %cst_24 = arith.constant 0.000000e+00 : f32
      %97 = vector.shape_cast %57 : vector<1x256xf32> to vector<1x256xf32>
      %98 = vector.broadcast %97 : vector<1x256xf32> to vector<256x256xf32>
      %99 = vector.broadcast %cst_24 : f32 to vector<256x256xf32>
      %100 = arith.select %96, %98, %99 : vector<256x256xi1>, vector<256x256xf32>
      %101 = vector.shape_cast %54 : vector<1x256xf32> to vector<1x256xf32>
      %102 = vector.broadcast %101 : vector<1x256xf32> to vector<256x256xf32>
      %103 = arith.select %94, %102, %100 : vector<256x256xi1>, vector<256x256xf32>
      %104 = arith.addf %92, %103 : vector<256x256xf32>
      %c0_25 = arith.constant 0 : index
      %c0_26 = arith.constant 0 : index
      %105 = arith.index_cast %77 : i32 to index
      %106 = vector.load %arg5[%c0_25, %c0_26, %105] : memref<1x4x256xf32, #tpu.memory_space<vmem>>, vector<1x4x256xf32>
      %107 = vector.shape_cast %106 : vector<1x4x256xf32> to vector<4x256xf32>
      %c0_27 = arith.constant 0 : index
      %c0_28 = arith.constant 0 : index
      %108 = vector.load %arg7[%c0_27, %c0_28] : memref<4x256xf32, #tpu.memory_space<vmem>>, vector<4x256xf32>
      %cst_29 = arith.constant dense<0.000000e+00> : vector<4x256xf32>
      %109 = tpu.matmul %107, %104, %cst_29 {dimension_numbers = #tpu.dot_dimension_numbers<[1], [0], [0], [1], [0, 0, 1, 1], [], []>} : vector<4x256xf32>, vector<256x256xf32>, vector<4x256xf32> -> vector<4x256xf32>
      %110 = arith.addf %108, %109 : vector<4x256xf32>
      %c0_30 = arith.constant 0 : index
      %c0_31 = arith.constant 0 : index
      %111 = vector.load %arg7[%c0_30, %c0_31] : memref<4x256xf32, #tpu.memory_space<vmem>>, vector<4x256xf32>
      tpu.vector_store %arg7[%c0_30, %c0_31], %110 {strides = array<i32>} : memref<4x256xf32, #tpu.memory_space<vmem>>, vector<4x256xf32>,
    }
    %c0_15 = arith.constant 0 : index
    %c0_16 = arith.constant 0 : index
    %72 = vector.load %arg7[%c0_15, %c0_16] : memref<4x256xf32, #tpu.memory_space<vmem>>, vector<4x256xf32>
    %c0_17 = arith.constant 0 : index
    %c0_18 = arith.constant 0 : index
    %c0_19 = arith.constant 0 : index
    %73 = vector.load %arg6[%c0_17, %c0_18, %c0_19] : memref<1x4x256xf32, #tpu.memory_space<vmem>>, vector<1x4x256xf32>
    %74 = vector.shape_cast %73 : vector<1x4x256xf32> to vector<4x256xf32>
    %75 = vector.shape_cast %72 : vector<4x256xf32> to vector<1x4x256xf32>
    tpu.vector_store %arg6[%c0_17, %c0_18, %c0_19], %75 {strides = array<i32>} : memref<1x4x256xf32, #tpu.memory_space<vmem>>, vector<1x4x256xf32>,
    return
  }
  func.func @transform_0(%arg0: i32, %arg1: i32, %arg2: memref<2xi32, #tpu.memory_space<smem>>, %arg3: memref<2xi32, #tpu.memory_space<smem>>) -> (i32, i32, i32) {
    %c0_i32 = arith.constant 0 : i32
    %c0_i32_0 = arith.constant 0 : i32
    return %arg0, %c0_i32, %arg1 : i32, i32, i32
  }
  func.func @transform_1(%arg0: i32, %arg1: i32, %arg2: memref<2xi32, #tpu.memory_space<smem>>, %arg3: memref<2xi32, #tpu.memory_space<smem>>) -> (i32, i32, i32) {
    %c0_i32 = arith.constant 0 : i32
    %c0_i32_0 = arith.constant 0 : i32
    %c0_i32_1 = arith.constant 0 : i32
    return %arg0, %c0_i32, %c0_i32_0 : i32, i32, i32
  }
  func.func @transform_2(%arg0: i32, %arg1: i32, %arg2: memref<2xi32, #tpu.memory_space<smem>>, %arg3: memref<2xi32, #tpu.memory_space<smem>>) -> (i32, i32, i32) {
    %c0_i32 = arith.constant 0 : i32
    %c0_i32_0 = arith.constant 0 : i32
    return %arg0, %c0_i32, %arg1 : i32, i32, i32
  }
}

</mosaic_0001>

<llo_original>
// kernel: tpu_custom_call.1
$region0: #{tpu_custom_call.1}
  #allocation0 [shape = 'u32[]', space=smem, size = 0x4, offset = 0x4, fixed_abs, tag = 'smem constant byte address 0x4 - core index']
  #allocation1 [shape = 'u32[144,128]{1,0:T(1,128)}', space=vmem, size = 0x12000, scoped, tag = 'internal scratch']
  #allocation2 [shape = 'f32[4,256]{1,0:T(4,128)}', space=vmem, size = 0x1000, scoped, tag = 'scratch operand']
  #allocation3 [shape = 's32[1]{0}', space=sflag, size = 0x4, scoped, tag = 'scoped memory for tpu_custom_call.1']
  #allocation4 [shape = 'u8[512]{0}', space=smem, size = 0x200, scoped, tag = 'prefetched SMEM operand 0']
  #allocation5 [shape = 'u8[512]{0}', space=smem, size = 0x200, scoped, tag = 'prefetched SMEM operand 1']
  %s0 = inlined_call_operand.hbm [shape: s32[2], index: 0, kind: input, shape index: {}]
  %s1 = inlined_call_operand.vmem [shape: s32[2], index: 1, kind: input, shape index: {}]
  %s2 = inlined_call_operand.hbm [shape: f32[2,2,256], index: 2, kind: input, shape index: {}]
  %s3 = inlined_call_operand.hbm [shape: f32[2,4,256], index: 3, kind: input, shape index: {}]
  %s4 = inlined_call_operand.hbm [shape: f32[2,4,256], index: 4, kind: output, shape index: {}]
  %s5 = sld [smem:[#allocation0]]
  $region56: #{tpu_custom_call.1} parent=0
    _
  %s7 = ssub.s32 1, %s5
  %s8 = scalar_select 0, %s7, %s5
  %10 = dma.hbm_to_smem %s0, 16, [#allocation4], [#allocation3]
  %s11 = sshll.u32 %s1, 4
  %s12 = int_to_ptr.vmem [resolvable:$true] %s11
  %14 = dma.vmem_to_smem %s12, 16, [#allocation5], [#allocation3]
  %15 = dma.done [#allocation3], 32
  %16 = sfence
  $region1: #{tpu_custom_call.1} parent=0
    #allocation6 [shape = 'u8[4096]{0}', space=vmem, size = 0x1000, scoped, tag = 'input window, operand 2']
    #allocation7 [shape = 's32[2]{0}', space=sflag, size = 0x8, scoped, tag = 'scoped memory for tpu_custom_call.1']
    #allocation8 [shape = 's32[2]{0}', space=sflag, size = 0x8, scoped, tag = 'scoped memory for tpu_custom_call.1']
    #allocation9 [shape = 'u8[8192]{0}', space=vmem, size = 0x2000, scoped, tag = 'input window, operand 3']
    #allocation10 [shape = 's32[2]{0}', space=sflag, size = 0x8, scoped, tag = 'scoped memory for tpu_custom_call.1']
    #allocation11 [shape = 'u8[8192]{0}', space=vmem, size = 0x2000, scoped, tag = 'output window, operand 0']
    %17 = vsyncpa [#allocation7], 0
    %s18 = scalar_lea.sflag [#allocation7], 1
    %19 = vsyncpa %s18, 0
    %20 = vsyncpa [#allocation10], 0
    %s21 = scalar_lea.sflag [#allocation10], 1
    %22 = vsyncpa %s21, 0
    %23 = vsyncpa [#allocation8], 0
    %s24 = scalar_lea.sflag [#allocation8], 1
    %25 = vsyncpa %s24, 0
    loop: start=0, step=1, limit=4
    $region2: #{tpu_custom_call.1} parent=1 // loop_pre_header
      _
    $region3: #{tpu_custom_call.1} parent=1 // loop_header
      %s27 = sphi 0, %s31
      %p28 = scmp.ge.s32.totalorder %s27, 4
      %s34 = sphi 0, %s46
      %s35 = sphi 0, %s42
      %s36 = sphi 0, %s34
      %s37 = sphi 0, %s35
      %s38 = sphi 0, %s36
      %s39 = sphi 0, %s37
      %s51 = sphi 0, %s53
      %s54 = sphi 0, %s51
      %s55 = sphi 0, %s54
      %s71 = sphi 0, %s55
      %s77 = sphi 0, %s79
      %s80 = sphi 0, %s77
      %s81 = sphi 0, %s80
      %s97 = sphi 0, %s81
      %s105 = sphi 0, %s107
      %s108 = sphi 0, %s105
      %s109 = sphi 0, %s108
      %s125 = sphi 0, %s109
    $region4: #{tpu_custom_call.1} parent=1 // loop_header_branch
      %30 = sbr.rel (%p28) target = $region8
    $region5: #{tpu_custom_call.1} parent=1 // loop_body
      %s32 = ssub.s32 %s27, 1
      %s33 = ssub.s32 %s27, 2
      %s40 = sadd.s32 1, %s35
      %p41 = scmp.ge.s32.totalorder %s40, 1
      %s42 = scalar_select %p41, 0, %s40
      %s43 = sadd.s32 1, %s34
      %s44 = scalar_select %p41, %s43, %s34
      %p45 = scmp.ge.s32.totalorder %s44, 2
      %s46 = scalar_select %p45, 0, %s44
      %s47 = ssub.s32 %s34, %s46
      %s48 = ssub.s32 %s35, %s42
      %s49 = sor.u32 %s47, %s48
      %p50 = scmp.eq.s32.totalorder %s49, 0
      %s52 = sadd.s32 %s51, 1
      %s53 = scalar_select %p50, %s51, %s52
      %p56 = pneg %p50
      %p57 = scmp.eq.s32.totalorder %s27, 1
      %p58 = por %p56, %p57
      %p59 = scmp.ne.s32.totalorder %s51, %s54
      %p60 = scmp.eq.s32.totalorder %s27, 0
      %p61 = por %p59, %p60
      %p62 = scmp.ne.s32.totalorder %s51, %s54
      %p63 = scmp.eq.s32.totalorder %s32, 1
      %p64 = por %p62, %p63
      %p65 = scmp.ne.s32.totalorder %s54, %s55
      %p66 = scmp.eq.s32.totalorder %s32, 0
      %p67 = por %p65, %p66
      %p68 = scmp.ne.s32.totalorder %s54, %s55
      %p69 = scmp.eq.s32.totalorder %s33, 1
      %p70 = por %p68, %p69
      %p72 = scmp.ne.s32.totalorder %s55, %s71
      %p73 = scmp.eq.s32.totalorder %s33, 0
      %p74 = por %p72, %p73
      %s75 = ssub.s32 %s34, %s46
      %p76 = scmp.eq.s32.totalorder %s75, 0
      %s78 = sadd.s32 %s77, 1
      %s79 = scalar_select %p76, %s77, %s78
      %p82 = pneg %p76
      %p83 = scmp.eq.s32.totalorder %s27, 1
      %p84 = por %p82, %p83
      %p85 = scmp.ne.s32.totalorder %s77, %s80
      %p86 = scmp.eq.s32.totalorder %s27, 0
      %p87 = por %p85, %p86
      %p88 = scmp.ne.s32.totalorder %s77, %s80
      %p89 = scmp.eq.s32.totalorder %s32, 1
      %p90 = por %p88, %p89
      %p91 = scmp.ne.s32.totalorder %s80, %s81
      %p92 = scmp.eq.s32.totalorder %s32, 0
      %p93 = por %p91, %p92
      %p94 = scmp.ne.s32.totalorder %s80, %s81
      %p95 = scmp.eq.s32.totalorder %s33, 1
      %p96 = por %p94, %p95
      %p98 = scmp.ne.s32.totalorder %s81, %s97
      %p99 = scmp.eq.s32.totalorder %s33, 0
      %p100 = por %p98, %p99
      %s101 = ssub.s32 %s34, %s46
      %s102 = ssub.s32 %s35, %s42
      %s103 = sor.u32 %s101, %s102
      %p104 = scmp.eq.s32.totalorder %s103, 0
      %s106 = sadd.s32 %s105, 1
      %s107 = scalar_select %p104, %s105, %s106
      %p110 = pneg %p104
      %p111 = scmp.eq.s32.totalorder %s27, 1
      %p112 = por %p110, %p111
      %p113 = scmp.ne.s32.totalorder %s105, %s108
      %p114 = scmp.eq.s32.totalorder %s27, 0
      %p115 = por %p113, %p114
      %p116 = scmp.ne.s32.totalorder %s105, %s108
      %p117 = scmp.eq.s32.totalorder %s32, 1
      %p118 = por %p116, %p117
      %p119 = scmp.ne.s32.totalorder %s108, %s109
      %p120 = scmp.eq.s32.totalorder %s32, 0
      %p121 = por %p119, %p120
      %p122 = scmp.ne.s32.totalorder %s108, %s109
      %p123 = scmp.eq.s32.totalorder %s33, 1
      %p124 = por %p122, %p123
      %p126 = scmp.ne.s32.totalorder %s109, %s125
      %p127 = scmp.eq.s32.totalorder %s33, 0
      %p128 = por %p126, %p127
      %p129 = scmp.le.s32.totalorder 1, %s27
      %p130 = scmp.lt.s32.totalorder %s27, 3
      %p131 = pnand %p129, %p130
      %p132 = pneg %p131
      // Predicated region
      $region9: #{tpu_custom_call.1} parent=5 // pred_check
        _
      $region10: #{tpu_custom_call.1} parent=5 // pred_check_branch
        %134 = sbr.rel (%p131) target = $region12
      $region11: #{tpu_custom_call.1} parent=5 // pred_region
        %s135 = ssub.s32 %s27, 1
      $region12: #{tpu_custom_call.1} parent=5 // pred_fallthru
        _
      %p136 = scmp.lt.s32.totalorder %s27, 2
      // Predicated region
      $region13: #{tpu_custom_call.1} parent=5 // pred_check
        %p137 = pneg %p136
      $region14: #{tpu_custom_call.1} parent=5 // pred_check_branch
        %139 = sbr.rel (%p137) target = $region16
      $region15: #{tpu_custom_call.1} parent=5 // pred_region
        // Predicated region
        $region17: #{tpu_custom_call.1} parent=15 // pred_check
          %p140 = pneg %p61
        $region18: #{tpu_custom_call.1} parent=15 // pred_check_branch
          %142 = sbr.rel (%p140) target = $region20
        $region19: #{tpu_custom_call.1} parent=15 // pred_region
          %s143 = sand.u32 %s51, 1
          %s144 = scalar_lea.sflag [#allocation7], %s143
          %s145 = sand.u32 %s51, 1
          %s146 = smul.addr %s145, 4
          %s147 = scalar_lea.vmem [#allocation6], %s146
          %s148 = smul.u32 2, %s35
          %s150 = ssub.s32 64, 64
          %151 = vsyncadd %s144, %s150
          %s152 = smul.addr %s34, 2
          %s153 = sadd.s32 %s148, %s152
          %s154 = smul.addr %s153, 32
          %s155 = scalar_lea.hbm %s2, %s154
          %s157 = sshll.u32 %s147, 4
          %s158 = int_to_ptr.vmem [resolvable:$true] %s157
          %160 = dma.hbm_to_vmem [thread:$0]  %s155, 64, %s158, %s144
        $region20: #{tpu_custom_call.1} parent=15 // pred_fallthru
          _
        // Predicated region
        $region21: #{tpu_custom_call.1} parent=15 // pred_check
          %p161 = pneg %p87
        $region22: #{tpu_custom_call.1} parent=15 // pred_check_branch
          %163 = sbr.rel (%p161) target = $region24
        $region23: #{tpu_custom_call.1} parent=15 // pred_region
          %s164 = sand.u32 %s77, 1
          %s165 = scalar_lea.sflag [#allocation10], %s164
          %s166 = sand.u32 %s77, 1
          %s167 = smul.addr %s166, 8
          %s168 = scalar_lea.vmem [#allocation9], %s167
          %s170 = ssub.s32 128, 128
          %171 = vsyncadd %s165, %s170
          %s172 = smul.addr %s34, 2
          %s173 = smul.addr %s172, 64
          %s174 = scalar_lea.hbm %s3, %s173
          %s176 = sshll.u32 %s168, 4
          %s177 = int_to_ptr.vmem [resolvable:$true] %s176
          %179 = dma.hbm_to_vmem [thread:$0]  %s174, 128, %s177, %s165
        $region24: #{tpu_custom_call.1} parent=15 // pred_fallthru
          _
      $region16: #{tpu_custom_call.1} parent=5 // pred_fallthru
        _
      %p180 = scmp.le.s32.totalorder 1, %s27
      %p181 = scmp.lt.s32.totalorder %s27, 3
      %p182 = pnand %p180, %p181
      %p183 = pneg %p182
      // Predicated region
      $region25: #{tpu_custom_call.1} parent=5 // pred_check
        _
      $region26: #{tpu_custom_call.1} parent=5 // pred_check_branch
        %185 = sbr.rel (%p182) target = $region28
      $region27: #{tpu_custom_call.1} parent=5 // pred_region
        %s186 = ssub.s32 %s27, 1
        %s187 = sand.u32 %s54, 1
        %s188 = scalar_lea.sflag [#allocation7], %s187
        %s189 = sand.u32 %s54, 1
        %s190 = smul.addr %s189, 4
        %s191 = scalar_lea.vmem [#allocation6], %s190
        // Predicated region
        $region29: #{tpu_custom_call.1} parent=27 // pred_check
          %p192 = pneg %p67
        $region30: #{tpu_custom_call.1} parent=27 // pred_check_branch
          %194 = sbr.rel (%p192) target = $region32
        $region31: #{tpu_custom_call.1} parent=27 // pred_region
          %195 = dma.done %s188, 64
        $region32: #{tpu_custom_call.1} parent=27 // pred_fallthru
          _
        %s196 = sand.u32 %s80, 1
        %s197 = scalar_lea.sflag [#allocation10], %s196
        %s198 = sand.u32 %s80, 1
        %s199 = smul.addr %s198, 8
        %s200 = scalar_lea.vmem [#allocation9], %s199
        // Predicated region
        $region33: #{tpu_custom_call.1} parent=27 // pred_check
          %p201 = pneg %p93
        $region34: #{tpu_custom_call.1} parent=27 // pred_check_branch
          %203 = sbr.rel (%p201) target = $region36
        $region35: #{tpu_custom_call.1} parent=27 // pred_region
          %204 = dma.done %s197, 128
        $region36: #{tpu_custom_call.1} parent=27 // pred_fallthru
          _
        %s205 = sand.u32 %s54, 1
        %s206 = scalar_lea.sflag [#allocation7], %s205
        %s207 = sand.u32 %s54, 1
        %s208 = smul.addr %s207, 4
        %s209 = scalar_lea.vmem [#allocation6], %s208
        %p210 = pneg %p67
        %p211 = pneg %p64
        %s212 = sand.u32 %s80, 1
        %s213 = scalar_lea.sflag [#allocation10], %s212
        %s214 = sand.u32 %s80, 1
        %s215 = smul.addr %s214, 8
        %s216 = scalar_lea.vmem [#allocation9], %s215
        %p217 = pneg %p93
        %p218 = pneg %p90
        %p219 = pneg %p121
        %p220 = pneg %p118
        %s221 = sand.u32 %s108, 1
        %s222 = scalar_lea.sflag [#allocation8], %s221
        %s223 = sand.u32 %s108, 1
        %s224 = smul.addr %s223, 8
        %s225 = scalar_lea.vmem [#allocation11], %s224
        %s226 = smul.u32 2, %s37
        %s227 = smul.u32 2, %s37
        %v228 = vld [vmem:[%s191] sm:$0xf]
        %v229 = vfloor.f32 %v228
        %v230 = vsub.f32 %v228, %v229
        %v231 = vcvt.f32.s32.to.zero.pseudo %v229
        %vm232 = vcmp.ge.s32.totalorder %v231, 0
        %vm233 = vcmp.lt.s32.totalorder %v231, 16
        %vm234 = vmand %vm232, %vm233
        %v235 = vsel %vm234, 1, 0
        %v236 = vcvt.s32.f32 %v235
        %vm237 = vcmp.ge.s32.totalorder %v231, 4294967295
        %vm238 = vcmp.lt.s32.totalorder %v231, 15
        %vm239 = vmand %vm237, %vm238
        %v240 = vsel %vm239, 1, 0
        %v241 = vcvt.s32.f32 %v240
        %v242 = vsub.f32 1.0, %v230
        %v244 = vrot.slane %v242, 7
        %v245 = vrot.slane %v244, 2
        %v247 = vmul.f32 %v242, %v245
        %v248 = vmul.f32 %v247, %v236
        %v250 = vrot.slane %v236, 7
        %v251 = vrot.slane %v250, 2
        %v253 = vmul.f32 %v248, %v251
        %v255 = vrot.slane %v230, 7
        %v256 = vrot.slane %v255, 2
        %v258 = vmul.f32 %v242, %v256
        %v259 = vmul.f32 %v258, %v236
        %v261 = vrot.slane %v241, 7
        %v262 = vrot.slane %v261, 2
        %v264 = vmul.f32 %v259, %v262
        %v265 = vmul.f32 %v230, %v245
        %v266 = vmul.f32 %v265, %v241
        %v267 = vmul.f32 %v266, %v251
        %v268 = vmul.f32 %v230, %v256
        %v269 = vmul.f32 %v268, %v241
        %v270 = vmul.f32 %v269, %v262
        %v271 = vmul.u32 %v231, 16
        %v272 = vrot.slane %v231, 7
        %v273 = vrot.slane %v272, 2
        %v274 = vadd.s32 %v271, %v273
        %v275 = vlaneseq
        %v276 = vshrl.u32 %v275, 7
        %v277 = vadd.s32 %v276, 8
        %v278 = vadd.s32 %v276, 16
        %v279 = vadd.s32 %v276, 24
        %v280 = vadd.s32 %v276, 32
        %v281 = vadd.s32 %v276, 40
        %v282 = vadd.s32 %v276, 48
        %v283 = vadd.s32 %v276, 56
        %v284 = vadd.s32 %v276, 64
        %v285 = vadd.s32 %v276, 72
        %v286 = vadd.s32 %v276, 80
        %v287 = vadd.s32 %v276, 88
        %v288 = vadd.s32 %v276, 96
        %v289 = vadd.s32 %v276, 104
        %v290 = vadd.s32 %v276, 112
        %v291 = vadd.s32 %v276, 120
        %v292 = vadd.s32 %v276, 128
        %v293 = vadd.s32 %v276, 136
        %v294 = vadd.s32 %v276, 144
        %v295 = vadd.s32 %v276, 152
        %v296 = vadd.s32 %v276, 160
        %v297 = vadd.s32 %v276, 168
        %v298 = vadd.s32 %v276, 176
        %v299 = vadd.s32 %v276, 184
        %v300 = vadd.s32 %v276, 192
        %v301 = vadd.s32 %v276, 200
        %v302 = vadd.s32 %v276, 208
        %v303 = vadd.s32 %v276, 216
        %v304 = vadd.s32 %v276, 224
        %v305 = vadd.s32 %v276, 232
        %v306 = vadd.s32 %v276, 240
        %v307 = vadd.s32 %v276, 248
        %308 = vst [vmem:[#allocation2] sm:$0xff] 0.0
        %s309 = sadd.s32 %s36, %s37
        %s310 = sld [smem:[#allocation4 + %s309]]
        %s311 = sld [smem:[#allocation5 + %s309]]
        // While loop
        $region37: #{tpu_custom_call.1} parent=27 // loop_pre_header
          _
        $region38: #{tpu_custom_call.1} parent=27 // loop_header
          %s313 = sphi %s310, %s315
          %p314 = scmp.ge.s32.totalorder %s313, %s311
        $region39: #{tpu_custom_call.1} parent=27 // loop_header_branch
          %317 = sbr.rel (%p314) target = $region43
        $region40: #{tpu_custom_call.1} parent=27 // loop_body
          %s318 = smul.u32 %s313, 256
          %v319 = vstv %s318
          %v320 = vsub.s32 %v274, %v319
          %v321 = vlaneseq
          %v322 = vshrl.u32 %v321, 7
          %v323 = vsub.s32 0, %v322
          %v324 = vrot.slane %v320, %v323
          %v325 = vlaneseq
          %v326 = vshrl.u32 %v325, 7
          %v327 = vsub.s32 2, %v326
          %v328 = vrot.slane %v320, %v327
          %v329 = vlaneseq
          %v330 = vshrl.u32 %v329, 7
          %v331 = vsub.s32 0, %v330
          %v332 = vrot.slane %v324, %v331
          %v333 = vlaneseq
          %v334 = vshrl.u32 %v333, 7
          %v335 = vsub.s32 0, %v334
          %v336 = vrot.slane %v328, %v335
          %v337 = vsub.s32 %v276, %v332
          %v338 = vsub.s32 %v276, %v336
          %v339 = vsub.s32 %v277, %v332
          %v340 = vsub.s32 %v277, %v336
          %v341 = vsub.s32 %v278, %v332
          %v342 = vsub.s32 %v278, %v336
          %v343 = vsub.s32 %v279, %v332
          %v344 = vsub.s32 %v279, %v336
          %v345 = vsub.s32 %v280, %v332
          %v346 = vsub.s32 %v280, %v336
          %v347 = vsub.s32 %v281, %v332
          %v348 = vsub.s32 %v281, %v336
          %v349 = vsub.s32 %v282, %v332
          %v350 = vsub.s32 %v282, %v336
          %v351 = vsub.s32 %v283, %v332
          %v352 = vsub.s32 %v283, %v336
          %v353 = vsub.s32 %v284, %v332
          %v354 = vsub.s32 %v284, %v336
          %v355 = vsub.s32 %v285, %v332
          %v356 = vsub.s32 %v285, %v336
          %v357 = vsub.s32 %v286, %v332
          %v358 = vsub.s32 %v286, %v336
          %v359 = vsub.s32 %v287, %v332
          %v360 = vsub.s32 %v287, %v336
          %v361 = vsub.s32 %v288, %v332
          %v362 = vsub.s32 %v288, %v336
          %v363 = vsub.s32 %v289, %v332
          %v364 = vsub.s32 %v289, %v336
          %v365 = vsub.s32 %v290, %v332
          %v366 = vsub.s32 %v290, %v336
          %v367 = vsub.s32 %v291, %v332
          %v368 = vsub.s32 %v291, %v336
          %v369 = vsub.s32 %v292, %v332
          %v370 = vsub.s32 %v292, %v336
          %v371 = vsub.s32 %v293, %v332
          %v372 = vsub.s32 %v293, %v336
          %v373 = vsub.s32 %v294, %v332
          %v374 = vsub.s32 %v294, %v336
          %v375 = vsub.s32 %v295, %v332
          %v376 = vsub.s32 %v295, %v336
          %v377 = vsub.s32 %v296, %v332
          %v378 = vsub.s32 %v296, %v336
          %v379 = vsub.s32 %v297, %v332
          %v380 = vsub.s32 %v297, %v336
          %v381 = vsub.s32 %v298, %v332
          %v382 = vsub.s32 %v298, %v336
          %v383 = vsub.s32 %v299, %v332
          %v384 = vsub.s32 %v299, %v336
          %v385 = vsub.s32 %v300, %v332
          %v386 = vsub.s32 %v300, %v336
          %v387 = vsub.s32 %v301, %v332
          %v388 = vsub.s32 %v301, %v336
          %v389 = vsub.s32 %v302, %v332
          %v390 = vsub.s32 %v302, %v336
          %v391 = vsub.s32 %v303, %v332
          %v392 = vsub.s32 %v303, %v336
          %v393 = vsub.s32 %v304, %v332
          %v394 = vsub.s32 %v304, %v336
          %v395 = vsub.s32 %v305, %v332
          %v396 = vsub.s32 %v305, %v336
          %v397 = vsub.s32 %v306, %v332
          %v398 = vsub.s32 %v306, %v336
          %v399 = vsub.s32 %v307, %v332
          %v400 = vsub.s32 %v307, %v336
          %vm401 = vcmp.eq.s32.totalorder %v337, 0
          %vm402 = vcmp.eq.s32.totalorder %v338, 0
          %vm403 = vcmp.eq.s32.totalorder %v339, 0
          %vm404 = vcmp.eq.s32.totalorder %v340, 0
          %vm405 = vcmp.eq.s32.totalorder %v341, 0
          %vm406 = vcmp.eq.s32.totalorder %v342, 0
          %vm407 = vcmp.eq.s32.totalorder %v343, 0
          %vm408 = vcmp.eq.s32.totalorder %v344, 0
          %vm409 = vcmp.eq.s32.totalorder %v345, 0
          %vm410 = vcmp.eq.s32.totalorder %v346, 0
          %vm411 = vcmp.eq.s32.totalorder %v347, 0
          %vm412 = vcmp.eq.s32.totalorder %v348, 0
          %vm413 = vcmp.eq.s32.totalorder %v349, 0
          %vm414 = vcmp.eq.s32.totalorder %v350, 0
          %vm415 = vcmp.eq.s32.totalorder %v351, 0
          %vm416 = vcmp.eq.s32.totalorder %v352, 0
          %vm417 = vcmp.eq.s32.totalorder %v353, 0
          %vm418 = vcmp.eq.s32.totalorder %v354, 0
          %vm419 = vcmp.eq.s32.totalorder %v355, 0
          %vm420 = vcmp.eq.s32.totalorder %v356, 0
          %vm421 = vcmp.eq.s32.totalorder %v357, 0
          %vm422 = vcmp.eq.s32.totalorder %v358, 0
          %vm423 = vcmp.eq.s32.totalorder %v359, 0
          %vm424 = vcmp.eq.s32.totalorder %v360, 0
          %vm425 = vcmp.eq.s32.totalorder %v361, 0
          %vm426 = vcmp.eq.s32.totalorder %v362, 0
          %vm427 = vcmp.eq.s32.totalorder %v363, 0
          %vm428 = vcmp.eq.s32.totalorder %v364, 0
          %vm429 = vcmp.eq.s32.totalorder %v365, 0
          %vm430 = vcmp.eq.s32.totalorder %v366, 0
          %vm431 = vcmp.eq.s32.totalorder %v367, 0
          %vm432 = vcmp.eq.s32.totalorder %v368, 0
          %vm433 = vcmp.eq.s32.totalorder %v369, 0
          %vm434 = vcmp.eq.s32.totalorder %v370, 0
          %vm435 = vcmp.eq.s32.totalorder %v371, 0
          %vm436 = vcmp.eq.s32.totalorder %v372, 0
          %vm437 = vcmp.eq.s32.totalorder %v373, 0
          %vm438 = vcmp.eq.s32.totalorder %v374, 0
          %vm439 = vcmp.eq.s32.totalorder %v375, 0
          %vm440 = vcmp.eq.s32.totalorder %v376, 0
          %vm441 = vcmp.eq.s32.totalorder %v377, 0
          %vm442 = vcmp.eq.s32.totalorder %v378, 0
          %vm443 = vcmp.eq.s32.totalorder %v379, 0
          %vm444 = vcmp.eq.s32.totalorder %v380, 0
          %vm445 = vcmp.eq.s32.totalorder %v381, 0
          %vm446 = vcmp.eq.s32.totalorder %v382, 0
          %vm447 = vcmp.eq.s32.totalorder %v383, 0
          %vm448 = vcmp.eq.s32.totalorder %v384, 0
          %vm449 = vcmp.eq.s32.totalorder %v385, 0
          %vm450 = vcmp.eq.s32.totalorder %v386, 0
          %vm451 = vcmp.eq.s32.totalorder %v387, 0
          %vm452 = vcmp.eq.s32.totalorder %v388, 0
          %vm453 = vcmp.eq.s32.totalorder %v389, 0
          %vm454 = vcmp.eq.s32.totalorder %v390, 0
          %vm455 = vcmp.eq.s32.totalorder %v391, 0
          %vm456 = vcmp.eq.s32.totalorder %v392, 0
          %vm457 = vcmp.eq.s32.totalorder %v393, 0
          %vm458 = vcmp.eq.s32.totalorder %v394, 0
          %vm459 = vcmp.eq.s32.totalorder %v395, 0
          %vm460 = vcmp.eq.s32.totalorder %v396, 0
          %vm461 = vcmp.eq.s32.totalorder %v397, 0
          %vm462 = vcmp.eq.s32.totalorder %v398, 0
          %vm463 = vcmp.eq.s32.totalorder %v399, 0
          %vm464 = vcmp.eq.s32.totalorder %v400, 0
          %vm465 = vcmp.eq.s32.totalorder %v337, 1
          %vm466 = vcmp.eq.s32.totalorder %v338, 1
          %vm467 = vcmp.eq.s32.totalorder %v339, 1
          %vm468 = vcmp.eq.s32.totalorder %v340, 1
          %vm469 = vcmp.eq.s32.totalorder %v341, 1
          %vm470 = vcmp.eq.s32.totalorder %v342, 1
          %vm471 = vcmp.eq.s32.totalorder %v343, 1
          %vm472 = vcmp.eq.s32.totalorder %v344, 1
          %vm473 = vcmp.eq.s32.totalorder %v345, 1
          %vm474 = vcmp.eq.s32.totalorder %v346, 1
          %vm475 = vcmp.eq.s32.totalorder %v347, 1
          %vm476 = vcmp.eq.s32.totalorder %v348, 1
          %vm477 = vcmp.eq.s32.totalorder %v349, 1
          %vm478 = vcmp.eq.s32.totalorder %v350, 1
          %vm479 = vcmp.eq.s32.totalorder %v351, 1
          %vm480 = vcmp.eq.s32.totalorder %v352, 1
          %vm481 = vcmp.eq.s32.totalorder %v353, 1
          %vm482 = vcmp.eq.s32.totalorder %v354, 1
          %vm483 = vcmp.eq.s32.totalorder %v355, 1
          %vm484 = vcmp.eq.s32.totalorder %v356, 1
          %vm485 = vcmp.eq.s32.totalorder %v357, 1
          %vm486 = vcmp.eq.s32.totalorder %v358, 1
          %vm487 = vcmp.eq.s32.totalorder %v359, 1
          %vm488 = vcmp.eq.s32.totalorder %v360, 1
          %vm489 = vcmp.eq.s32.totalorder %v361, 1
          %vm490 = vcmp.eq.s32.totalorder %v362, 1
          %vm491 = vcmp.eq.s32.totalorder %v363, 1
          %vm492 = vcmp.eq.s32.totalorder %v364, 1
          %vm493 = vcmp.eq.s32.totalorder %v365, 1
          %vm494 = vcmp.eq.s32.totalorder %v366, 1
          %vm495 = vcmp.eq.s32.totalorder %v367, 1
          %vm496 = vcmp.eq.s32.totalorder %v368, 1
          %vm497 = vcmp.eq.s32.totalorder %v369, 1
          %vm498 = vcmp.eq.s32.totalorder %v370, 1
          %vm499 = vcmp.eq.s32.totalorder %v371, 1
          %vm500 = vcmp.eq.s32.totalorder %v372, 1
          %vm501 = vcmp.eq.s32.totalorder %v373, 1
          %vm502 = vcmp.eq.s32.totalorder %v374, 1
          %vm503 = vcmp.eq.s32.totalorder %v375, 1
          %vm504 = vcmp.eq.s32.totalorder %v376, 1
          %vm505 = vcmp.eq.s32.totalorder %v377, 1
          %vm506 = vcmp.eq.s32.totalorder %v378, 1
          %vm507 = vcmp.eq.s32.totalorder %v379, 1
          %vm508 = vcmp.eq.s32.totalorder %v380, 1
          %vm509 = vcmp.eq.s32.totalorder %v381, 1
          %vm510 = vcmp.eq.s32.totalorder %v382, 1
          %vm511 = vcmp.eq.s32.totalorder %v383, 1
          %vm512 = vcmp.eq.s32.totalorder %v384, 1
          %vm513 = vcmp.eq.s32.totalorder %v385, 1
          %vm514 = vcmp.eq.s32.totalorder %v386, 1
          %vm515 = vcmp.eq.s32.totalorder %v387, 1
          %vm516 = vcmp.eq.s32.totalorder %v388, 1
          %vm517 = vcmp.eq.s32.totalorder %v389, 1
          %vm518 = vcmp.eq.s32.totalorder %v390, 1
          %vm519 = vcmp.eq.s32.totalorder %v391, 1
          %vm520 = vcmp.eq.s32.totalorder %v392, 1
          %vm521 = vcmp.eq.s32.totalorder %v393, 1
          %vm522 = vcmp.eq.s32.totalorder %v394, 1
          %vm523 = vcmp.eq.s32.totalorder %v395, 1
          %vm524 = vcmp.eq.s32.totalorder %v396, 1
          %vm525 = vcmp.eq.s32.totalorder %v397, 1
          %vm526 = vcmp.eq.s32.totalorder %v398, 1
          %vm527 = vcmp.eq.s32.totalorder %v399, 1
          %vm528 = vcmp.eq.s32.totalorder %v400, 1
          %v530 = vlaneseq
          %v531 = vshrl.u32 %v530, 7
          %v532 = vsub.s32 0, %v531
          %v533 = vrot.slane %v264, %v532
          %v534 = vlaneseq
          %v535 = vshrl.u32 %v534, 7
          %v536 = vsub.s32 2, %v535
          %v537 = vrot.slane %v264, %v536
          %v540 = vlaneseq
          %v541 = vshrl.u32 %v540, 7
          %v542 = vsub.s32 0, %v541
          %v543 = vrot.slane %v533, %v542
          %v544 = vlaneseq
          %v545 = vshrl.u32 %v544, 7
          %v546 = vsub.s32 0, %v545
          %v547 = vrot.slane %v537, %v546
          %v548 = vsel %vm465, %v543, 0.0
          %v549 = vsel %vm466, %v547, 0.0
          %v550 = vsel %vm467, %v543, 0.0
          %v551 = vsel %vm468, %v547, 0.0
          %v552 = vsel %vm469, %v543, 0.0
          %v553 = vsel %vm470, %v547, 0.0
          %v554 = vsel %vm471, %v543, 0.0
          %v555 = vsel %vm472, %v547, 0.0
          %v556 = vsel %vm473, %v543, 0.0
          %v557 = vsel %vm474, %v547, 0.0
          %v558 = vsel %vm475, %v543, 0.0
          %v559 = vsel %vm476, %v547, 0.0
          %v560 = vsel %vm477, %v543, 0.0
          %v561 = vsel %vm478, %v547, 0.0
          %v562 = vsel %vm479, %v543, 0.0
          %v563 = vsel %vm480, %v547, 0.0
          %v564 = vsel %vm481, %v543, 0.0
          %v565 = vsel %vm482, %v547, 0.0
          %v566 = vsel %vm483, %v543, 0.0
          %v567 = vsel %vm484, %v547, 0.0
          %v568 = vsel %vm485, %v543, 0.0
          %v569 = vsel %vm486, %v547, 0.0
          %v570 = vsel %vm487, %v543, 0.0
          %v571 = vsel %vm488, %v547, 0.0
          %v572 = vsel %vm489, %v543, 0.0
          %v573 = vsel %vm490, %v547, 0.0
          %v574 = vsel %vm491, %v543, 0.0
          %v575 = vsel %vm492, %v547, 0.0
          %v576 = vsel %vm493, %v543, 0.0
          %v577 = vsel %vm494, %v547, 0.0
          %v578 = vsel %vm495, %v543, 0.0
          %v579 = vsel %vm496, %v547, 0.0
          %v580 = vsel %vm497, %v543, 0.0
          %v581 = vsel %vm498, %v547, 0.0
          %v582 = vsel %vm499, %v543, 0.0
          %v583 = vsel %vm500, %v547, 0.0
          %v584 = vsel %vm501, %v543, 0.0
          %v585 = vsel %vm502, %v547, 0.0
          %v586 = vsel %vm503, %v543, 0.0
          %v587 = vsel %vm504, %v547, 0.0
          %v588 = vsel %vm505, %v543, 0.0
          %v589 = vsel %vm506, %v547, 0.0
          %v590 = vsel %vm507, %v543, 0.0
          %v591 = vsel %vm508, %v547, 0.0
          %v592 = vsel %vm509, %v543, 0.0
          %v593 = vsel %vm510, %v547, 0.0
          %v594 = vsel %vm511, %v543, 0.0
          %v595 = vsel %vm512, %v547, 0.0
          %v596 = vsel %vm513, %v543, 0.0
          %v597 = vsel %vm514, %v547, 0.0
          %v598 = vsel %vm515, %v543, 0.0
          %v599 = vsel %vm516, %v547, 0.0
          %v600 = vsel %vm517, %v543, 0.0
          %v601 = vsel %vm518, %v547, 0.0
          %v602 = vsel %vm519, %v543, 0.0
          %v603 = vsel %vm520, %v547, 0.0
          %v604 = vsel %vm521, %v543, 0.0
          %v605 = vsel %vm522, %v547, 0.0
          %v606 = vsel %vm523, %v543, 0.0
          %v607 = vsel %vm524, %v547, 0.0
          %v608 = vsel %vm525, %v543, 0.0
          %v609 = vsel %vm526, %v547, 0.0
          %v610 = vsel %vm527, %v543, 0.0
          %v611 = vsel %vm528, %v547, 0.0
          %v613 = vlaneseq
          %v614 = vshrl.u32 %v613, 7
          %v615 = vsub.s32 0, %v614
          %v616 = vrot.slane %v253, %v615
          %v617 = vlaneseq
          %v618 = vshrl.u32 %v617, 7
          %v619 = vsub.s32 2, %v618
          %v620 = vrot.slane %v253, %v619
          %v623 = vlaneseq
          %v624 = vshrl.u32 %v623, 7
          %v625 = vsub.s32 0, %v624
          %v626 = vrot.slane %v616, %v625
          %v627 = vlaneseq
          %v628 = vshrl.u32 %v627, 7
          %v629 = vsub.s32 0, %v628
          %v630 = vrot.slane %v620, %v629
          %v631 = vsel %vm401, %v626, %v548
          %v632 = vsel %vm402, %v630, %v549
          %v633 = vsel %vm403, %v626, %v550
          %v634 = vsel %vm404, %v630, %v551
          %v635 = vsel %vm405, %v626, %v552
          %v636 = vsel %vm406, %v630, %v553
          %v637 = vsel %vm407, %v626, %v554
          %v638 = vsel %vm408, %v630, %v555
          %v639 = vsel %vm409, %v626, %v556
          %v640 = vsel %vm410, %v630, %v557
          %v641 = vsel %vm411, %v626, %v558
          %v642 = vsel %vm412, %v630, %v559
          %v643 = vsel %vm413, %v626, %v560
          %v644 = vsel %vm414, %v630, %v561
          %v645 = vsel %vm415, %v626, %v562
          %v646 = vsel %vm416, %v630, %v563
          %v647 = vsel %vm417, %v626, %v564
          %v648 = vsel %vm418, %v630, %v565
          %v649 = vsel %vm419, %v626, %v566
          %v650 = vsel %vm420, %v630, %v567
          %v651 = vsel %vm421, %v626, %v568
          %v652 = vsel %vm422, %v630, %v569
          %v653 = vsel %vm423, %v626, %v570
          %v654 = vsel %vm424, %v630, %v571
          %v655 = vsel %vm425, %v626, %v572
          %v656 = vsel %vm426, %v630, %v573
          %v657 = vsel %vm427, %v626, %v574
          %v658 = vsel %vm428, %v630, %v575
          %v659 = vsel %vm429, %v626, %v576
          %v660 = vsel %vm430, %v630, %v577
          %v661 = vsel %vm431, %v626, %v578
          %v662 = vsel %vm432, %v630, %v579
          %v663 = vsel %vm433, %v626, %v580
          %v664 = vsel %vm434, %v630, %v581
          %v665 = vsel %vm435, %v626, %v582
          %v666 = vsel %vm436, %v630, %v583
          %v667 = vsel %vm437, %v626, %v584
          %v668 = vsel %vm438, %v630, %v585
          %v669 = vsel %vm439, %v626, %v586
          %v670 = vsel %vm440, %v630, %v587
          %v671 = vsel %vm441, %v626, %v588
          %v672 = vsel %vm442, %v630, %v589
          %v673 = vsel %vm443, %v626, %v590
          %v674 = vsel %vm444, %v630, %v591
          %v675 = vsel %vm445, %v626, %v592
          %v676 = vsel %vm446, %v630, %v593
          %v677 = vsel %vm447, %v626, %v594
          %v678 = vsel %vm448, %v630, %v595
          %v679 = vsel %vm449, %v626, %v596
          %v680 = vsel %vm450, %v630, %v597
          %v681 = vsel %vm451, %v626, %v598
          %v682 = vsel %vm452, %v630, %v599
          %v683 = vsel %vm453, %v626, %v600
          %v684 = vsel %vm454, %v630, %v601
          %v685 = vsel %vm455, %v626, %v602
          %v686 = vsel %vm456, %v630, %v603
          %v687 = vsel %vm457, %v626, %v604
          %v688 = vsel %vm458, %v630, %v605
          %v689 = vsel %vm459, %v626, %v606
          %v690 = vsel %vm460, %v630, %v607
          %v691 = vsel %vm461, %v626, %v608
          %v692 = vsel %vm462, %v630, %v609
          %v693 = vsel %vm463, %v626, %v610
          %v694 = vsel %vm464, %v630, %v611
          %vm695 = vcmp.eq.s32.totalorder %v337, 16
          %vm696 = vcmp.eq.s32.totalorder %v338, 16
          %vm697 = vcmp.eq.s32.totalorder %v339, 16
          %vm698 = vcmp.eq.s32.totalorder %v340, 16
          %vm699 = vcmp.eq.s32.totalorder %v341, 16
          %vm700 = vcmp.eq.s32.totalorder %v342, 16
          %vm701 = vcmp.eq.s32.totalorder %v343, 16
          %vm702 = vcmp.eq.s32.totalorder %v344, 16
          %vm703 = vcmp.eq.s32.totalorder %v345, 16
          %vm704 = vcmp.eq.s32.totalorder %v346, 16
          %vm705 = vcmp.eq.s32.totalorder %v347, 16
          %vm706 = vcmp.eq.s32.totalorder %v348, 16
          %vm707 = vcmp.eq.s32.totalorder %v349, 16
          %vm708 = vcmp.eq.s32.totalorder %v350, 16
          %vm709 = vcmp.eq.s32.totalorder %v351, 16
          %vm710 = vcmp.eq.s32.totalorder %v352, 16
          %vm711 = vcmp.eq.s32.totalorder %v353, 16
          %vm712 = vcmp.eq.s32.totalorder %v354, 16
          %vm713 = vcmp.eq.s32.totalorder %v355, 16
          %vm714 = vcmp.eq.s32.totalorder %v356, 16
          %vm715 = vcmp.eq.s32.totalorder %v357, 16
          %vm716 = vcmp.eq.s32.totalorder %v358, 16
          %vm717 = vcmp.eq.s32.totalorder %v359, 16
          %vm718 = vcmp.eq.s32.totalorder %v360, 16
          %vm719 = vcmp.eq.s32.totalorder %v361, 16
          %vm720 = vcmp.eq.s32.totalorder %v362, 16
          %vm721 = vcmp.eq.s32.totalorder %v363, 16
          %vm722 = vcmp.eq.s32.totalorder %v364, 16
          %vm723 = vcmp.eq.s32.totalorder %v365, 16
          %vm724 = vcmp.eq.s32.totalorder %v366, 16
          %vm725 = vcmp.eq.s32.totalorder %v367, 16
          %vm726 = vcmp.eq.s32.totalorder %v368, 16
          %vm727 = vcmp.eq.s32.totalorder %v369, 16
          %vm728 = vcmp.eq.s32.totalorder %v370, 16
          %vm729 = vcmp.eq.s32.totalorder %v371, 16
          %vm730 = vcmp.eq.s32.totalorder %v372, 16
          %vm731 = vcmp.eq.s32.totalorder %v373, 16
          %vm732 = vcmp.eq.s32.totalorder %v374, 16
          %vm733 = vcmp.eq.s32.totalorder %v375, 16
          %vm734 = vcmp.eq.s32.totalorder %v376, 16
          %vm735 = vcmp.eq.s32.totalorder %v377, 16
          %vm736 = vcmp.eq.s32.totalorder %v378, 16
          %vm737 = vcmp.eq.s32.totalorder %v379, 16
          %vm738 = vcmp.eq.s32.totalorder %v380, 16
          %vm739 = vcmp.eq.s32.totalorder %v381, 16
          %vm740 = vcmp.eq.s32.totalorder %v382, 16
          %vm741 = vcmp.eq.s32.totalorder %v383, 16
          %vm742 = vcmp.eq.s32.totalorder %v384, 16
          %vm743 = vcmp.eq.s32.totalorder %v385, 16
          %vm744 = vcmp.eq.s32.totalorder %v386, 16
          %vm745 = vcmp.eq.s32.totalorder %v387, 16
          %vm746 = vcmp.eq.s32.totalorder %v388, 16
          %vm747 = vcmp.eq.s32.totalorder %v389, 16
          %vm748 = vcmp.eq.s32.totalorder %v390, 16
          %vm749 = vcmp.eq.s32.totalorder %v391, 16
          %vm750 = vcmp.eq.s32.totalorder %v392, 16
          %vm751 = vcmp.eq.s32.totalorder %v393, 16
          %vm752 = vcmp.eq.s32.totalorder %v394, 16
          %vm753 = vcmp.eq.s32.totalorder %v395, 16
          %vm754 = vcmp.eq.s32.totalorder %v396, 16
          %vm755 = vcmp.eq.s32.totalorder %v397, 16
          %vm756 = vcmp.eq.s32.totalorder %v398, 16
          %vm757 = vcmp.eq.s32.totalorder %v399, 16
          %vm758 = vcmp.eq.s32.totalorder %v400, 16
          %vm759 = vcmp.eq.s32.totalorder %v337, 17
          %vm760 = vcmp.eq.s32.totalorder %v338, 17
          %vm761 = vcmp.eq.s32.totalorder %v339, 17
          %vm762 = vcmp.eq.s32.totalorder %v340, 17
          %vm763 = vcmp.eq.s32.totalorder %v341, 17
          %vm764 = vcmp.eq.s32.totalorder %v342, 17
          %vm765 = vcmp.eq.s32.totalorder %v343, 17
          %vm766 = vcmp.eq.s32.totalorder %v344, 17
          %vm767 = vcmp.eq.s32.totalorder %v345, 17
          %vm768 = vcmp.eq.s32.totalorder %v346, 17
          %vm769 = vcmp.eq.s32.totalorder %v347, 17
          %vm770 = vcmp.eq.s32.totalorder %v348, 17
          %vm771 = vcmp.eq.s32.totalorder %v349, 17
          %vm772 = vcmp.eq.s32.totalorder %v350, 17
          %vm773 = vcmp.eq.s32.totalorder %v351, 17
          %vm774 = vcmp.eq.s32.totalorder %v352, 17
          %vm775 = vcmp.eq.s32.totalorder %v353, 17
          %vm776 = vcmp.eq.s32.totalorder %v354, 17
          %vm777 = vcmp.eq.s32.totalorder %v355, 17
          %vm778 = vcmp.eq.s32.totalorder %v356, 17
          %vm779 = vcmp.eq.s32.totalorder %v357, 17
          %vm780 = vcmp.eq.s32.totalorder %v358, 17
          %vm781 = vcmp.eq.s32.totalorder %v359, 17
          %vm782 = vcmp.eq.s32.totalorder %v360, 17
          %vm783 = vcmp.eq.s32.totalorder %v361, 17
          %vm784 = vcmp.eq.s32.totalorder %v362, 17
          %vm785 = vcmp.eq.s32.totalorder %v363, 17
          %vm786 = vcmp.eq.s32.totalorder %v364, 17
          %vm787 = vcmp.eq.s32.totalorder %v365, 17
          %vm788 = vcmp.eq.s32.totalorder %v366, 17
          %vm789 = vcmp.eq.s32.totalorder %v367, 17
          %vm790 = vcmp.eq.s32.totalorder %v368, 17
          %vm791 = vcmp.eq.s32.totalorder %v369, 17
          %vm792 = vcmp.eq.s32.totalorder %v370, 17
          %vm793 = vcmp.eq.s32.totalorder %v371, 17
          %vm794 = vcmp.eq.s32.totalorder %v372, 17
          %vm795 = vcmp.eq.s32.totalorder %v373, 17
          %vm796 = vcmp.eq.s32.totalorder %v374, 17
          %vm797 = vcmp.eq.s32.totalorder %v375, 17
          %vm798 = vcmp.eq.s32.totalorder %v376, 17
          %vm799 = vcmp.eq.s32.totalorder %v377, 17
          %vm800 = vcmp.eq.s32.totalorder %v378, 17
          %vm801 = vcmp.eq.s32.totalorder %v379, 17
          %vm802 = vcmp.eq.s32.totalorder %v380, 17
          %vm803 = vcmp.eq.s32.totalorder %v381, 17
          %vm804 = vcmp.eq.s32.totalorder %v382, 17
          %vm805 = vcmp.eq.s32.totalorder %v383, 17
          %vm806 = vcmp.eq.s32.totalorder %v384, 17
          %vm807 = vcmp.eq.s32.totalorder %v385, 17
          %vm808 = vcmp.eq.s32.totalorder %v386, 17
          %vm809 = vcmp.eq.s32.totalorder %v387, 17
          %vm810 = vcmp.eq.s32.totalorder %v388, 17
          %vm811 = vcmp.eq.s32.totalorder %v389, 17
          %vm812 = vcmp.eq.s32.totalorder %v390, 17
          %vm813 = vcmp.eq.s32.totalorder %v391, 17
          %vm814 = vcmp.eq.s32.totalorder %v392, 17
          %vm815 = vcmp.eq.s32.totalorder %v393, 17
          %vm816 = vcmp.eq.s32.totalorder %v394, 17
          %vm817 = vcmp.eq.s32.totalorder %v395, 17
          %vm818 = vcmp.eq.s32.totalorder %v396, 17
          %vm819 = vcmp.eq.s32.totalorder %v397, 17
          %vm820 = vcmp.eq.s32.totalorder %v398, 17
          %vm821 = vcmp.eq.s32.totalorder %v399, 17
          %vm822 = vcmp.eq.s32.totalorder %v400, 17
          %v824 = vlaneseq
          %v825 = vshrl.u32 %v824, 7
          %v826 = vsub.s32 0, %v825
          %v827 = vrot.slane %v270, %v826
          %v828 = vlaneseq
          %v829 = vshrl.u32 %v828, 7
          %v830 = vsub.s32 2, %v829
          %v831 = vrot.slane %v270, %v830
          %v834 = vlaneseq
          %v835 = vshrl.u32 %v834, 7
          %v836 = vsub.s32 0, %v835
          %v837 = vrot.slane %v827, %v836
          %v838 = vlaneseq
          %v839 = vshrl.u32 %v838, 7
          %v840 = vsub.s32 0, %v839
          %v841 = vrot.slane %v831, %v840
          %v842 = vsel %vm759, %v837, 0.0
          %v843 = vsel %vm760, %v841, 0.0
          %v844 = vsel %vm761, %v837, 0.0
          %v845 = vsel %vm762, %v841, 0.0
          %v846 = vsel %vm763, %v837, 0.0
          %v847 = vsel %vm764, %v841, 0.0
          %v848 = vsel %vm765, %v837, 0.0
          %v849 = vsel %vm766, %v841, 0.0
          %v850 = vsel %vm767, %v837, 0.0
          %v851 = vsel %vm768, %v841, 0.0
          %v852 = vsel %vm769, %v837, 0.0
          %v853 = vsel %vm770, %v841, 0.0
          %v854 = vsel %vm771, %v837, 0.0
          %v855 = vsel %vm772, %v841, 0.0
          %v856 = vsel %vm773, %v837, 0.0
          %v857 = vsel %vm774, %v841, 0.0
          %v858 = vsel %vm775, %v837, 0.0
          %v859 = vsel %vm776, %v841, 0.0
          %v860 = vsel %vm777, %v837, 0.0
          %v861 = vsel %vm778, %v841, 0.0
          %v862 = vsel %vm779, %v837, 0.0
          %v863 = vsel %vm780, %v841, 0.0
          %v864 = vsel %vm781, %v837, 0.0
          %v865 = vsel %vm782, %v841, 0.0
          %v866 = vsel %vm783, %v837, 0.0
          %v867 = vsel %vm784, %v841, 0.0
          %v868 = vsel %vm785, %v837, 0.0
          %v869 = vsel %vm786, %v841, 0.0
          %v870 = vsel %vm787, %v837, 0.0
          %v871 = vsel %vm788, %v841, 0.0
          %v872 = vsel %vm789, %v837, 0.0
          %v873 = vsel %vm790, %v841, 0.0
          %v874 = vsel %vm791, %v837, 0.0
          %v875 = vsel %vm792, %v841, 0.0
          %v876 = vsel %vm793, %v837, 0.0
          %v877 = vsel %vm794, %v841, 0.0
          %v878 = vsel %vm795, %v837, 0.0
          %v879 = vsel %vm796, %v841, 0.0
          %v880 = vsel %vm797, %v837, 0.0
          %v881 = vsel %vm798, %v841, 0.0
          %v882 = vsel %vm799, %v837, 0.0
          %v883 = vsel %vm800, %v841, 0.0
          %v884 = vsel %vm801, %v837, 0.0
          %v885 = vsel %vm802, %v841, 0.0
          %v886 = vsel %vm803, %v837, 0.0
          %v887 = vsel %vm804, %v841, 0.0
          %v888 = vsel %vm805, %v837, 0.0
          %v889 = vsel %vm806, %v841, 0.0
          %v890 = vsel %vm807, %v837, 0.0
          %v891 = vsel %vm808, %v841, 0.0
          %v892 = vsel %vm809, %v837, 0.0
          %v893 = vsel %vm810, %v841, 0.0
          %v894 = vsel %vm811, %v837, 0.0
          %v895 = vsel %vm812, %v841, 0.0
          %v896 = vsel %vm813, %v837, 0.0
          %v897 = vsel %vm814, %v841, 0.0
          %v898 = vsel %vm815, %v837, 0.0
          %v899 = vsel %vm816, %v841, 0.0
          %v900 = vsel %vm817, %v837, 0.0
          %v901 = vsel %vm818, %v841, 0.0
          %v902 = vsel %vm819, %v837, 0.0
          %v903 = vsel %vm820, %v841, 0.0
          %v904 = vsel %vm821, %v837, 0.0
          %v905 = vsel %vm822, %v841, 0.0
          %v907 = vlaneseq
          %v908 = vshrl.u32 %v907, 7
          %v909 = vsub.s32 0, %v908
          %v910 = vrot.slane %v267, %v909
          %v911 = vlaneseq
          %v912 = vshrl.u32 %v911, 7
          %v913 = vsub.s32 2, %v912
          %v914 = vrot.slane %v267, %v913
          %v917 = vlaneseq
          %v918 = vshrl.u32 %v917, 7
          %v919 = vsub.s32 0, %v918
          %v920 = vrot.slane %v910, %v919
          %v921 = vlaneseq
          %v922 = vshrl.u32 %v921, 7
          %v923 = vsub.s32 0, %v922
          %v924 = vrot.slane %v914, %v923
          %v925 = vsel %vm695, %v920, %v842
          %v926 = vsel %vm696, %v924, %v843
          %v927 = vsel %vm697, %v920, %v844
          %v928 = vsel %vm698, %v924, %v845
          %v929 = vsel %vm699, %v920, %v846
          %v930 = vsel %vm700, %v924, %v847
          %v931 = vsel %vm701, %v920, %v848
          %v932 = vsel %vm702, %v924, %v849
          %v933 = vsel %vm703, %v920, %v850
          %v934 = vsel %vm704, %v924, %v851
          %v935 = vsel %vm705, %v920, %v852
          %v936 = vsel %vm706, %v924, %v853
          %v937 = vsel %vm707, %v920, %v854
          %v938 = vsel %vm708, %v924, %v855
          %v939 = vsel %vm709, %v920, %v856
          %v940 = vsel %vm710, %v924, %v857
          %v941 = vsel %vm711, %v920, %v858
          %v942 = vsel %vm712, %v924, %v859
          %v943 = vsel %vm713, %v920, %v860
          %v944 = vsel %vm714, %v924, %v861
          %v945 = vsel %vm715, %v920, %v862
          %v946 = vsel %vm716, %v924, %v863
          %v947 = vsel %vm717, %v920, %v864
          %v948 = vsel %vm718, %v924, %v865
          %v949 = vsel %vm719, %v920, %v866
          %v950 = vsel %vm720, %v924, %v867
          %v951 = vsel %vm721, %v920, %v868
          %v952 = vsel %vm722, %v924, %v869
          %v953 = vsel %vm723, %v920, %v870
          %v954 = vsel %vm724, %v924, %v871
          %v955 = vsel %vm725, %v920, %v872
          %v956 = vsel %vm726, %v924, %v873
          %v957 = vsel %vm727, %v920, %v874
          %v958 = vsel %vm728, %v924, %v875
          %v959 = vsel %vm729, %v920, %v876
          %v960 = vsel %vm730, %v924, %v877
          %v961 = vsel %vm731, %v920, %v878
          %v962 = vsel %vm732, %v924, %v879
          %v963 = vsel %vm733, %v920, %v880
          %v964 = vsel %vm734, %v924, %v881
          %v965 = vsel %vm735, %v920, %v882
          %v966 = vsel %vm736, %v924, %v883
          %v967 = vsel %vm737, %v920, %v884
          %v968 = vsel %vm738, %v924, %v885
          %v969 = vsel %vm739, %v920, %v886
          %v970 = vsel %vm740, %v924, %v887
          %v971 = vsel %vm741, %v920, %v888
          %v972 = vsel %vm742, %v924, %v889
          %v973 = vsel %vm743, %v920, %v890
          %v974 = vsel %vm744, %v924, %v891
          %v975 = vsel %vm745, %v920, %v892
          %v976 = vsel %vm746, %v924, %v893
          %v977 = vsel %vm747, %v920, %v894
          %v978 = vsel %vm748, %v924, %v895
          %v979 = vsel %vm749, %v920, %v896
          %v980 = vsel %vm750, %v924, %v897
          %v981 = vsel %vm751, %v920, %v898
          %v982 = vsel %vm752, %v924, %v899
          %v983 = vsel %vm753, %v920, %v900
          %v984 = vsel %vm754, %v924, %v901
          %v985 = vsel %vm755, %v920, %v902
          %v986 = vsel %vm756, %v924, %v903
          %v987 = vsel %vm757, %v920, %v904
          %v988 = vsel %vm758, %v924, %v905
          %v989 = vadd.f32 %v631, %v925
          %v990 = vadd.f32 %v632, %v926
          %v991 = vadd.f32 %v633, %v927
          %v992 = vadd.f32 %v634, %v928
          %v993 = vadd.f32 %v635, %v929
          %v994 = vadd.f32 %v636, %v930
          %v995 = vadd.f32 %v637, %v931
          %v996 = vadd.f32 %v638, %v932
          %v997 = vadd.f32 %v639, %v933
          %v998 = vadd.f32 %v640, %v934
          %v999 = vadd.f32 %v641, %v935
          %v1000 = vadd.f32 %v642, %v936
          %v1001 = vadd.f32 %v643, %v937
          %v1002 = vadd.f32 %v644, %v938
          %v1003 = vadd.f32 %v645, %v939
          %v1004 = vadd.f32 %v646, %v940
          %v1005 = vadd.f32 %v647, %v941
          %v1006 = vadd.f32 %v648, %v942
          %v1007 = vadd.f32 %v649, %v943
          %v1008 = vadd.f32 %v650, %v944
          %v1009 = vadd.f32 %v651, %v945
          %v1010 = vadd.f32 %v652, %v946
          %v1011 = vadd.f32 %v653, %v947
          %v1012 = vadd.f32 %v654, %v948
          %v1013 = vadd.f32 %v655, %v949
          %v1014 = vadd.f32 %v656, %v950
          %v1015 = vadd.f32 %v657, %v951
          %v1016 = vadd.f32 %v658, %v952
          %v1017 = vadd.f32 %v659, %v953
          %v1018 = vadd.f32 %v660, %v954
          %v1019 = vadd.f32 %v661, %v955
          %v1020 = vadd.f32 %v662, %v956
          %v1021 = vadd.f32 %v663, %v957
          %v1022 = vadd.f32 %v664, %v958
          %v1023 = vadd.f32 %v665, %v959
          %v1024 = vadd.f32 %v666, %v960
          %v1025 = vadd.f32 %v667, %v961
          %v1026 = vadd.f32 %v668, %v962
          %v1027 = vadd.f32 %v669, %v963
          %v1028 = vadd.f32 %v670, %v964
          %v1029 = vadd.f32 %v671, %v965
          %v1030 = vadd.f32 %v672, %v966
          %v1031 = vadd.f32 %v673, %v967
          %v1032 = vadd.f32 %v674, %v968
          %v1033 = vadd.f32 %v675, %v969
          %v1034 = vadd.f32 %v676, %v970
          %v1035 = vadd.f32 %v677, %v971
          %v1036 = vadd.f32 %v678, %v972
          %v1037 = vadd.f32 %v679, %v973
          %v1038 = vadd.f32 %v680, %v974
          %v1039 = vadd.f32 %v681, %v975
          %v1040 = vadd.f32 %v682, %v976
          %v1041 = vadd.f32 %v683, %v977
          %v1042 = vadd.f32 %v684, %v978
          %v1043 = vadd.f32 %v685, %v979
          %v1044 = vadd.f32 %v686, %v980
          %v1045 = vadd.f32 %v687, %v981
          %v1046 = vadd.f32 %v688, %v982
          %v1047 = vadd.f32 %v689, %v983
          %v1048 = vadd.f32 %v690, %v984
          %v1049 = vadd.f32 %v691, %v985
          %v1050 = vadd.f32 %v692, %v986
          %v1051 = vadd.f32 %v693, %v987
          %v1052 = vadd.f32 %v694, %v988
          %s1053 = sshra.s32 %s318, 7
          %s1054 = sand.u32 %s318, 127
          %s1055 = smul.addr %s1053, 4
          %s1056 = scalar_lea.vmem %s200, %s1055 [#allocation9]
          %v1057 = vld [vmem:[%s1056] sm:$0xff]
          %v1058 = vld [vmem:[#allocation2] sm:$0xff]
          %v1060 = vcombine.high %v1057, %v1057
          %1062 = vmatprep.subr.mxu0 %v1020
          %1063 = vmatpush1.msra.mxu0 %v1019
          %1064 = vmatprep.subr.mxu0 %v1018
          %1065 = vmatpush1.msra.mxu0 %v1017
          %1066 = vmatprep.subr.mxu0 %v1016
          %1067 = vmatpush1.msra.mxu0 %v1015
          %1068 = vmatprep.subr.mxu0 %v1014
          %1069 = vmatpush1.msra.mxu0 %v1013
          %1070 = vmatprep.subr.mxu0 %v1012
          %1071 = vmatpush1.msra.mxu0 %v1011
          %1072 = vmatprep.subr.mxu0 %v1010
          %1073 = vmatpush1.msra.mxu0 %v1009
          %1074 = vmatprep.subr.mxu0 %v1008
          %1075 = vmatpush1.msra.mxu0 %v1007
          %1076 = vmatprep.subr.mxu0 %v1006
          %1077 = vmatpush1.msra.mxu0 %v1005
          %1078 = vmatprep.subr.mxu0 %v1004
          %1079 = vmatpush1.msra.mxu0 %v1003
          %1080 = vmatprep.subr.mxu0 %v1002
          %1081 = vmatpush1.msra.mxu0 %v1001
          %1082 = vmatprep.subr.mxu0 %v1000
          %1083 = vmatpush1.msra.mxu0 %v999
          %1084 = vmatprep.subr.mxu0 %v998
          %1085 = vmatpush1.msra.mxu0 %v997
          %1086 = vmatprep.subr.mxu0 %v996
          %1087 = vmatpush1.msra.mxu0 %v995
          %1088 = vmatprep.subr.mxu0 %v994
          %1089 = vmatpush1.msra.mxu0 %v993
          %1090 = vmatprep.subr.mxu0 %v992
          %1091 = vmatpush1.msra.mxu0 %v991
          %1092 = vmatprep.subr.mxu0 %v990
          %1093 = vmatpush1.msra.mxu0 %v989
          %1094 = vmatprep.subr.mxu0 %v1052
          %1095 = vmatpush2.msra.mxu0 %v1051
          %1096 = vmatprep.subr.mxu0 %v1050
          %1097 = vmatpush2.msra.mxu0 %v1049
          %1098 = vmatprep.subr.mxu0 %v1048
          %1099 = vmatpush2.msra.mxu0 %v1047
          %1100 = vmatprep.subr.mxu0 %v1046
          %1101 = vmatpush2.msra.mxu0 %v1045
          %1102 = vmatprep.subr.mxu0 %v1044
          %1103 = vmatpush2.msra.mxu0 %v1043
          %1104 = vmatprep.subr.mxu0 %v1042
          %1105 = vmatpush2.msra.mxu0 %v1041
          %1106 = vmatprep.subr.mxu0 %v1040
          %1107 = vmatpush2.msra.mxu0 %v1039
          %1108 = vmatprep.subr.mxu0 %v1038
          %1109 = vmatpush2.msra.mxu0 %v1037
          %1110 = vmatprep.subr.mxu0 %v1036
          %1111 = vmatpush2.msra.mxu0 %v1035
          %1112 = vmatprep.subr.mxu0 %v1034
          %1113 = vmatpush2.msra.mxu0 %v1033
          %1114 = vmatprep.subr.mxu0 %v1032
          %1115 = vmatpush2.msra.mxu0 %v1031
          %1116 = vmatprep.subr.mxu0 %v1030
          %1117 = vmatpush2.msra.mxu0 %v1029
          %1118 = vmatprep.subr.mxu0 %v1028
          %1119 = vmatpush2.msra.mxu0 %v1027
          %1120 = vmatprep.subr.mxu0 %v1026
          %1121 = vmatpush2.msra.mxu0 %v1025
          %1122 = vmatprep.subr.mxu0 %v1024
          %1123 = vmatpush2.msra.mxu0 %v1023
          %1124 = vmatprep.subr.mxu0 %v1022
          %1125 = vmatpush2.msra.mxu0 %v1021
          %1126 = vmatprep.mubr.f32.mxu0 %v1060
          %1127 = vmatmul.mubr.f32.gmra.mxu0 %v1057
          %v1128 = vpop.f32.mrf.mxu0
          %v1129 = vadd.f32 0.0, %v1128
          %v1130 = vpop.f32.mrf.mxu0
          %v1131 = vadd.f32 0.0, %v1130
          %1132 = vdwg.mxu0
          %v1135 = vcombine.low %v1129, %v1131
          %v1137 = vadd.f32 %v1058, %v1135
          %1138 = vst [vmem:[#allocation2] sm:$0xff] %v1137
        $region41: #{tpu_custom_call.1} parent=27 // loop_footer
          %s315 = sadd.s32 %s313, 1
        $region42: #{tpu_custom_call.1} parent=27 // loop_footer_branch
          %312 = sbr.rel target = $region38
        $region43: #{tpu_custom_call.1} parent=27 // loop_exit
          _
        %v1139 = vld [vmem:[#allocation2] sm:$0xff]
        %1140 = vst [vmem:[%s225] sm:$0xff] %v1139
        %s1141 = sand.u32 %s108, 1
        %s1142 = scalar_lea.sflag [#allocation8], %s1141
        %s1143 = sand.u32 %s108, 1
        %s1144 = smul.addr %s1143, 8
        %s1145 = scalar_lea.vmem [#allocation11], %s1144
        // Predicated region
        $region44: #{tpu_custom_call.1} parent=27 // pred_check
          %p1146 = pneg %p118
        $region45: #{tpu_custom_call.1} parent=27 // pred_check_branch
          %1148 = sbr.rel (%p1146) target = $region47
        $region46: #{tpu_custom_call.1} parent=27 // pred_region
          %s1149 = smul.u32 2, %s37
          %s1151 = ssub.s32 128, 128
          %1152 = vsyncadd %s1142, %s1151
          %s1153 = smul.addr %s36, 2
          %s1154 = sadd.s32 %s1149, %s1153
          %s1155 = smul.addr %s1154, 64
          %s1156 = scalar_lea.hbm %s4, %s1155
          %s1158 = sshll.u32 %s1145, 4
          %s1159 = int_to_ptr.vmem [resolvable:$true] %s1158
          %1161 = dma.vmem_to_hbm [thread:$0]  %s1159, 128, %s1156, %s1142
        $region47: #{tpu_custom_call.1} parent=27 // pred_fallthru
          _
      $region28: #{tpu_custom_call.1} parent=5 // pred_fallthru
        _
      %p1162 = scmp.le.s32.totalorder 2, %s27
      // Predicated region
      $region48: #{tpu_custom_call.1} parent=5 // pred_check
        %p1163 = pneg %p1162
      $region49: #{tpu_custom_call.1} parent=5 // pred_check_branch
        %1165 = sbr.rel (%p1163) target = $region51
      $region50: #{tpu_custom_call.1} parent=5 // pred_region
        %s1166 = ssub.s32 %s27, 2
        // Predicated region
        $region52: #{tpu_custom_call.1} parent=50 // pred_check
          %p1167 = pneg %p124
        $region53: #{tpu_custom_call.1} parent=50 // pred_check_branch
          %1169 = sbr.rel (%p1167) target = $region55
        $region54: #{tpu_custom_call.1} parent=50 // pred_region
          %s1170 = sand.u32 %s109, 1
          %s1171 = scalar_lea.sflag [#allocation8], %s1170
          %s1172 = sand.u32 %s109, 1
          %s1173 = smul.addr %s1172, 8
          %s1174 = scalar_lea.vmem [#allocation11], %s1173
          %1175 = dma.done %s1171, 128
        $region55: #{tpu_custom_call.1} parent=50 // pred_fallthru
          _
      $region51: #{tpu_custom_call.1} parent=5 // pred_fallthru
        _
    $region6: #{tpu_custom_call.1} parent=1 // loop_footer
      %s31 = sadd.s32 1, %s27
    $region7: #{tpu_custom_call.1} parent=1 // loop_footer_branch
      %26 = sbr.rel target = $region3
    $region8: #{tpu_custom_call.1} parent=1 // loop_exit
      _
    %1176 = vsyncpa [#allocation7], 1
    %s1177 = scalar_lea.sflag [#allocation7], 1
    %1178 = vsyncpa %s1177, 1
    %1179 = vsyncpa [#allocation10], 1
    %s1180 = scalar_lea.sflag [#allocation10], 1
    %1181 = vsyncpa %s1180, 1
    %1182 = vsyncpa [#allocation8], 1
    %s1183 = scalar_lea.sflag [#allocation8], 1
    %1184 = vsyncpa %s1183, 1

</llo_original>
